<compile_context>
chip_gen: v6e
topology: v6e:2x2x1
jax: 0.10.0
libtpu: 0.0.40
codegen_flags: <defaults>
</compile_context>

<pallas_src>
import functools

import jax
import jax.numpy as jnp
from jax import lax
from jax.experimental import pallas as pl
from jax.experimental.pallas import tpu as pltpu

_LANE = 128
_SUBLANE = 8
_MIB = 1024 * 1024


def _round_up(x, m):
    return (x + m - 1) // m * m


def _device_kind():
    try:
        return jax.devices()[0].device_kind.lower()
    except Exception:
        return ""


@functools.lru_cache(maxsize=None)
def _budgets():
    """(per-block VMEM budget, vmem_limit_bytes) tuned per TPU generation."""
    kind = _device_kind()
    vmem_cap = None
    try:
        vmem_cap = getattr(pltpu.get_tpu_info(), "vmem_capacity_bytes", None)
    except Exception:
        vmem_cap = None
    is_v7 = ("7" in kind) or (vmem_cap is not None and vmem_cap <= 64 * _MIB)
    if is_v7:
        # 64 MiB/TC: 8 MiB in + 8 MiB out, double buffered ~= 32 MiB + headroom.
        return 8 * _MIB, 40 * _MIB
    if "v6" in kind:
        # 128 MiB physical VMEM, ~1.4 TB/s: bigger blocks shave per-step overhead.
        return 8 * _MIB, 64 * _MIB
    # v5e / older / unknown: conservative (default scoped limit is 16 MiB).
    return 4 * _MIB, 32 * _MIB


@functools.lru_cache(maxsize=None)
def _min_grid_steps():
    """Minimum number of 'parallel' grid steps so every TensorCore gets work."""
    kind = _device_kind()
    return 2 if ("7" in kind or "v4" in kind) else 1


def _row_align(itemsize):
    # Sub-32-bit dtypes pack 2/4 rows per sublane.
    return _SUBLANE * max(1, 4 // itemsize)


def _pick_row_tile(rows, lane_width, itemsize):
    """Largest aligned row tile fitting the padded-VMEM budget, capped so
    multi-TC chips always get >= 2 grid steps when splitting is possible."""
    align = _row_align(itemsize)
    lane_pad = _round_up(lane_width, _LANE)
    block_budget, _ = _budgets()
    max_rows = max(align, block_budget // (lane_pad * itemsize))
    tr = (max_rows // align) * align
    min_steps = _min_grid_steps()
    if min_steps > 1 and rows > align:
        tr = min(tr, _round_up(pl.cdiv(rows, min_steps), align))
    if tr >= rows:
        return rows  # full-extent block (allowed even if not 8-aligned)
    return max(tr, align)


# ---------------------------------------------------------------------------
# Kernels
# ---------------------------------------------------------------------------
def _ln_lastdim_kernel(x_ref, w_ref, b_ref, o_ref, *, eps, c):
    """Generic: normalize over the last (lane) dim of a (tr, C) block."""
    x = x_ref[...].astype(jnp.float32)                       # (tr, C)
    inv_c = 1.0 / c
    mean = jnp.sum(x, axis=-1, keepdims=True) * inv_c        # biased mean
    xc = x - mean
    var = jnp.sum(xc * xc, axis=-1, keepdims=True) * inv_c   # biased var
    inv = lax.rsqrt(var + eps)
    w = w_ref[...].astype(jnp.float32)                       # (1, C)
    b = b_ref[...].astype(jnp.float32)                       # (1, C)
    o_ref[...] = (xc * (inv * w) + b).astype(o_ref.dtype)


def _ln_packed_kernel(x_ref, w_ref, b_ref, o_ref, *, eps, c):
    """Lane-dense: (tr, 128) block holds 128//c groups of size c per row.

    Per-group all-reduce is an XOR butterfly over lanes using pltpu.roll
    (XLU) + select (VPU).  Single-pass E[x^2]-mean^2 variance keeps the two
    butterflies data-independent so they interleave on the XLU slots.
    """
    x = x_ref[...].astype(jnp.float32)                       # (tr, 128)
    lane = lax.broadcasted_iota(jnp.int32, x.shape, 1)

    def seg_allreduce(v):
        d = 1
        while d < c:
            up = pltpu.roll(v, _LANE - d, axis=1)            # value from lane j + d
            dn = pltpu.roll(v, d, axis=1)                    # value from lane j - d
            v = v + jnp.where((lane & d) == 0, up, dn)
            d *= 2
        return v

    inv_c = 1.0 / c
    s1 = seg_allreduce(x)            # independent chains -> interleave
    s2 = seg_allreduce(x * x)        # on the two XLU slots
    mean = s1 * inv_c
    var = jnp.maximum(s2 * inv_c - mean * mean, 0.0)
    inv = lax.rsqrt(var + eps)
    w = w_ref[...].astype(jnp.float32)                       # (1, 128) tiled weight
    b = b_ref[...].astype(jnp.float32)                       # (1, 128) tiled bias
    o_ref[...] = ((x - mean) * (inv * w) + b).astype(o_ref.dtype)


def _ln_cf_kernel(x_ref, w_ref, b_ref, o_ref, *, eps, c):
    """channels_first: block (1, C, t_hw); reduce over C (sublane axis)."""
    x = x_ref[...].astype(jnp.float32)                       # (1, C, t_hw)
    inv_c = 1.0 / c
    mean = jnp.sum(x, axis=1, keepdims=True) * inv_c         # (1, 1, t_hw)
    xc = x - mean
    var = jnp.sum(xc * xc, axis=1, keepdims=True) * inv_c
    inv = lax.rsqrt(var + eps)                               # (1, 1, t_hw)
    w = w_ref[...].astype(jnp.float32)                       # (1, C, 1)
    b = b_ref[...].astype(jnp.float32)                       # (1, C, 1)
    o_ref[...] = ((xc * inv) * w + b).astype(o_ref.dtype)


# ---------------------------------------------------------------------------
# pallas_call wrappers
# ---------------------------------------------------------------------------
def _compiler_params(n_axes):
    _, vmem_limit = _budgets()
    return pltpu.CompilerParams(
        dimension_semantics=("parallel",) * n_axes,
        vmem_limit_bytes=vmem_limit,
    )


def _ln_channels_last_2d(x2d, weight, bias, eps):
    """LayerNorm over the last dim of a (rows, C) array."""
    R, C = x2d.shape
    itemsize = x2d.dtype.itemsize
    cost = pl.CostEstimate(
        flops=8 * R * C, transcendentals=R, bytes_accessed=2 * R * C * itemsize)

    use_packed = (C < _LANE) and (_LANE % C == 0)

    if use_packed:
        g = _LANE // C                     # groups per 128-lane row
        R_pad = _round_up(R, g)            # pad ragged R instead of falling back
        xs = x2d if R_pad == R else jnp.pad(x2d, ((0, R_pad - R), (0, 0)))
        Rp = (R_pad * C) // _LANE
        xp = xs.reshape(Rp, _LANE)         # free reshape (contiguous)
        wp = jnp.tile(weight.reshape(1, C), (1, g))
        bp = jnp.tile(bias.reshape(1, C), (1, g))
        tr = _pick_row_tile(Rp, _LANE, itemsize)
        out = pl.pallas_call(
            functools.partial(_ln_packed_kernel, eps=eps, c=C),
            out_shape=jax.ShapeDtypeStruct((Rp, _LANE), x2d.dtype),
            grid_spec=pltpu.PrefetchScalarGridSpec(
                num_scalar_prefetch=0,
                grid=(pl.cdiv(Rp, tr),),
                in_specs=[
                    pl.BlockSpec((tr, _LANE), lambda i: (i, 0)),
                    pl.BlockSpec((1, _LANE), lambda i: (0, 0)),
                    pl.BlockSpec((1, _LANE), lambda i: (0, 0)),
                ],
                out_specs=pl.BlockSpec((tr, _LANE), lambda i: (i, 0)),
            ),
            compiler_params=_compiler_params(1),
            cost_estimate=cost,
        )(xp, wp, bp)
        out = out.reshape(R_pad, C)
        return out if R_pad == R else out[:R]

    tr = _pick_row_tile(R, C, itemsize)
    return pl.pallas_call(
        functools.partial(_ln_lastdim_kernel, eps=eps, c=C),
        out_shape=jax.ShapeDtypeStruct((R, C), x2d.dtype),
        grid_spec=pltpu.PrefetchScalarGridSpec(
            num_scalar_prefetch=0,
            grid=(pl.cdiv(R, tr),),
            in_specs=[
                pl.BlockSpec((tr, C), lambda i: (i, 0)),
                pl.BlockSpec((1, C), lambda i: (0, 0)),
                pl.BlockSpec((1, C), lambda i: (0, 0)),
            ],
            out_specs=pl.BlockSpec((tr, C), lambda i: (i, 0)),
        ),
        compiler_params=_compiler_params(1),
        cost_estimate=cost,
    )(x2d, weight.reshape(1, C), bias.reshape(1, C))


def _ln_channels_first(x, weight, bias, eps):
    """LayerNorm over the channel dim of an NCHW tensor, no transposes."""
    N, C, H, W = x.shape
    HW = H * W
    itemsize = x.dtype.itemsize
    x3 = x.reshape(N, C, HW)               # free reshape (contiguous)

    block_budget, _ = _budgets()
    c_pad = _round_up(C, _row_align(itemsize))
    max_lanes = max(_LANE, block_budget // (c_pad * itemsize))
    t_hw = (max_lanes // _LANE) * _LANE
    if t_hw >= HW:
        t_hw = HW                          # full-extent lane block
    # On multi-TC chips, if only one grid step would result, split the spatial
    # axis so both TensorCores get work.
    min_steps = _min_grid_steps()
    if min_steps > 1 and N * pl.cdiv(HW, t_hw) < min_steps and HW > _LANE:
        t_hw = min(t_hw, _round_up(pl.cdiv(HW, min_steps), _LANE))
    grid = (N, pl.cdiv(HW, t_hw))

    y3 = pl.pallas_call(
        functools.partial(_ln_cf_kernel, eps=eps, c=C),
        out_shape=jax.ShapeDtypeStruct((N, C, HW), x.dtype),
        grid_spec=pltpu.PrefetchScalarGridSpec(
            num_scalar_prefetch=0,
            grid=grid,
            in_specs=[
                pl.BlockSpec((1, C, t_hw), lambda n, j: (n, 0, j)),
                pl.BlockSpec((1, C, 1), lambda n, j: (0, 0, 0)),
                pl.BlockSpec((1, C, 1), lambda n, j: (0, 0, 0)),
            ],
            out_specs=pl.BlockSpec((1, C, t_hw), lambda n, j: (n, 0, j)),
        ),
        compiler_params=_compiler_params(2),
        cost_estimate=pl.CostEstimate(
            flops=8 * N * C * HW,
            transcendentals=N * HW,
            bytes_accessed=2 * N * C * HW * itemsize),
    )(x3, weight.reshape(1, C, 1), bias.reshape(1, C, 1))
    return y3.reshape(N, C, H, W)


# ---------------------------------------------------------------------------
# Module
# ---------------------------------------------------------------------------
class LayerNorm:
    """JAX/Pallas port of the PyTorch LayerNorm module (both data formats)."""

    def __init__(self, normalized_shape, eps=1e-05, data_format='channels_last'):
        if data_format not in ['channels_last', 'channels_first']:
            raise NotImplementedError
        self.weight = jnp.ones((normalized_shape,), dtype=jnp.float32)
        self.bias = jnp.zeros((normalized_shape,), dtype=jnp.float32)
        self.eps = eps
        self.data_format = data_format
        self.normalized_shape = (normalized_shape,)

    def __call__(self, x):
        C = self.normalized_shape[0]
        if self.data_format == 'channels_last':
            assert x.shape[-1] == C
            lead = x.shape[:-1]
            y2d = _ln_channels_last_2d(
                x.reshape(-1, C), self.weight, self.bias, self.eps)
            return y2d.reshape(*lead, C)
        else:
            assert x.shape[1] == C
            return _ln_channels_first(x, self.weight, self.bias, self.eps)


# ---------------------------------------------------------------------------
# References + self-test
# ---------------------------------------------------------------------------
def _ref_channels_first(x, w, b, eps):
    x = x.astype(jnp.float32)
    u = jnp.mean(x, axis=1, keepdims=True)
    s = jnp.mean((x - u) ** 2, axis=1, keepdims=True)
    xn = (x - u) / jnp.sqrt(s + eps)
    return w[None, :, None, None] * xn + b[None, :, None, None]


def _ref_channels_last(x, w, b, eps):
    x = x.astype(jnp.float32)
    u = jnp.mean(x, axis=-1, keepdims=True)
    s = jnp.mean((x - u) ** 2, axis=-1, keepdims=True)
    xn = (x - u) / jnp.sqrt(s + eps)
    return xn * w + b


if __name__ == "__main__":
    key = jax.random.PRNGKey(0)
    k1, k2, k3, k4, k5, k6 = jax.random.split(key, 6)

    # channels_first: NCHW input, normalized over C (no wrapper transposes).
    x_cf = jax.random.normal(k1, (2, 4, 16, 16), dtype=jnp.float32)
    ln_cf = LayerNorm(4, eps=1e-05, data_format='channels_first')
    y_cf = jax.block_until_ready(ln_cf(x_cf))
    ref_cf = _ref_channels_first(x_cf, ln_cf.weight, ln_cf.bias, ln_cf.eps)
    assert y_cf.shape == x_cf.shape
    assert jnp.max(jnp.abs(y_cf - ref_cf)) < 1e-4

    # channels_last, small C=4: lane-dense packed path.
    x_cl = jax.random.normal(k2, (2, 16, 16, 4), dtype=jnp.float32)
    ln_cl = LayerNorm(4, eps=1e-05, data_format='channels_last')
    y_cl = jax.block_until_ready(ln_cl(x_cl))
    ref_cl = _ref_channels_last(x_cl, ln_cl.weight, ln_cl.bias, ln_cl.eps)
    assert y_cl.shape == x_cl.shape
    assert jnp.max(jnp.abs(y_cl - ref_cl)) < 1e-4

    # channels_last, wider C=96: generic lane-reduce path.
    x_cw = jax.random.normal(k3, (2, 8, 96), dtype=jnp.float32)
    ln_cw = LayerNorm(96, eps=1e-05, data_format='channels_last')
    y_cw = jax.block_until_ready(ln_cw(x_cw))
    ref_cw = _ref_channels_last(x_cw, ln_cw.weight, ln_cw.bias, ln_cw.eps)
    assert y_cw.shape == x_cw.shape
    assert jnp.max(jnp.abs(y_cw - ref_cw)) < 1e-4

    # channels_last, C=64: newly-widened packed path.
    x_c64 = jax.random.normal(k4, (2, 8, 64), dtype=jnp.float32)
    ln_c64 = LayerNorm(64, eps=1e-05, data_format='channels_last')
    y_c64 = jax.block_until_ready(ln_c64(x_c64))
    ref_c64 = _ref_channels_last(x_c64, ln_c64.weight, ln_c64.bias, ln_c64.eps)
    assert y_c64.shape == x_c64.shape
    assert jnp.max(jnp.abs(y_c64 - ref_c64)) < 1e-4

    # channels_last, C=4 with ragged row count (R*C % 128 != 0): pad-and-slice path.
    x_rg = jax.random.normal(k5, (2, 7, 4), dtype=jnp.float32)
    ln_rg = LayerNorm(4, eps=1e-05, data_format='channels_last')
    y_rg = jax.block_until_ready(ln_rg(x_rg))
    ref_rg = _ref_channels_last(x_rg, ln_rg.weight, ln_rg.bias, ln_rg.eps)
    assert y_rg.shape == x_rg.shape
    assert jnp.max(jnp.abs(y_rg - ref_rg)) < 1e-4

    # channels_last, bf16 input (dtype-aware sublane alignment), C=8 packed.
    x_bf = jax.random.normal(k6, (2, 16, 16, 8), dtype=jnp.float32).astype(jnp.bfloat16)
    ln_bf = LayerNorm(8, eps=1e-05, data_format='channels_last')
    y_bf = jax.block_until_ready(ln_bf(x_bf))
    ref_bf = _ref_channels_last(x_bf, ln_bf.weight, ln_bf.bias, ln_bf.eps)
    assert y_bf.shape == x_bf.shape
    assert y_bf.dtype == jnp.bfloat16
    assert jnp.max(jnp.abs(y_bf.astype(jnp.float32) - ref_bf)) < 5e-2

    print("KERNEL_OK")
</pallas_src>

<mosaic_0001>
module attributes {stable_mosaic.version = 11 : i64} {
  func.func @_ln_cf_kernel(%arg0: i32, %arg1: i32, %arg2: memref<1x4x256xf32, #tpu.memory_space<vmem>>, %arg3: memref<1x4x1xf32, #tpu.memory_space<vmem>>, %arg4: memref<1x4x1xf32, #tpu.memory_space<vmem>>, %arg5: memref<1x4x256xf32, #tpu.memory_space<vmem>>) attributes {dimension_semantics = [#tpu.dimension_semantics<parallel>, #tpu.dimension_semantics<parallel>], iteration_bounds = array<i64: 2, 1>, scalar_prefetch = 0 : i64, scratch_operands = 0 : i64, tpu.core_type = #tpu.core_type<tc>, window_params = [{transform_indices = @transform_0, window_bounds = array<i64: 1, 4, 256>}, {pipeline_mode = #tpu.pipeline_mode<synchronous>, transform_indices = @transform_1, window_bounds = array<i64: 1, 4, 1>}, {pipeline_mode = #tpu.pipeline_mode<synchronous>, transform_indices = @transform_2, window_bounds = array<i64: 1, 4, 1>}, {transform_indices = @transform_3, window_bounds = array<i64: 1, 4, 256>}]} {
    %c0 = arith.constant 0 : index
    %c0_0 = arith.constant 0 : index
    %c0_1 = arith.constant 0 : index
    %0 = vector.load %arg2[%c0, %c0_0, %c0_1] : memref<1x4x256xf32, #tpu.memory_space<vmem>>, vector<1x4x256xf32>
    %cst = arith.constant dense<0.000000e+00> : vector<1x256xf32>
    %1 = vector.multi_reduction <add>, %0, %cst [1] : vector<1x4x256xf32> to vector<1x256xf32>
    %2 = vector.shape_cast %1 : vector<1x256xf32> to vector<1x1x256xf32>
    %cst_2 = arith.constant 2.500000e-01 : f32
    %3 = vector.broadcast %cst_2 : f32 to vector<1x1x256xf32>
    %4 = arith.mulf %2, %3 : vector<1x1x256xf32>
    %5 = vector.broadcast %4 : vector<1x1x256xf32> to vector<1x4x256xf32>
    %6 = arith.subf %0, %5 : vector<1x4x256xf32>
    %7 = arith.mulf %6, %6 : vector<1x4x256xf32>
    %cst_3 = arith.constant dense<0.000000e+00> : vector<1x256xf32>
    %8 = vector.multi_reduction <add>, %7, %cst_3 [1] : vector<1x4x256xf32> to vector<1x256xf32>
    %9 = vector.shape_cast %8 : vector<1x256xf32> to vector<1x1x256xf32>
    %cst_4 = arith.constant 2.500000e-01 : f32
    %10 = vector.broadcast %cst_4 : f32 to vector<1x1x256xf32>
    %11 = arith.mulf %9, %10 : vector<1x1x256xf32>
    %cst_5 = arith.constant 9.99999974E-6 : f32
    %12 = vector.broadcast %cst_5 : f32 to vector<1x1x256xf32>
    %13 = arith.addf %11, %12 : vector<1x1x256xf32>
    %14 = math.rsqrt %13 : vector<1x1x256xf32>
    %c0_6 = arith.constant 0 : index
    %c0_7 = arith.constant 0 : index
    %c0_8 = arith.constant 0 : index
    %15 = vector.load %arg3[%c0_6, %c0_7, %c0_8] : memref<1x4x1xf32, #tpu.memory_space<vmem>>, vector<1x4x1xf32>
    %c0_9 = arith.constant 0 : index
    %c0_10 = arith.constant 0 : index
    %c0_11 = arith.constant 0 : index
    %16 = vector.load %arg4[%c0_9, %c0_10, %c0_11] : memref<1x4x1xf32, #tpu.memory_space<vmem>>, vector<1x4x1xf32>
    %17 = vector.broadcast %14 : vector<1x1x256xf32> to vector<1x4x256xf32>
    %18 = arith.mulf %6, %17 : vector<1x4x256xf32>
    %19 = vector.broadcast %15 : vector<1x4x1xf32> to vector<1x4x256xf32>
    %20 = arith.mulf %18, %19 : vector<1x4x256xf32>
    %21 = vector.broadcast %16 : vector<1x4x1xf32> to vector<1x4x256xf32>
    %22 = arith.addf %20, %21 : vector<1x4x256xf32>
    %c0_12 = arith.constant 0 : index
    %c0_13 = arith.constant 0 : index
    %c0_14 = arith.constant 0 : index
    %23 = vector.load %arg5[%c0_12, %c0_13, %c0_14] : memref<1x4x256xf32, #tpu.memory_space<vmem>>, vector<1x4x256xf32>
    tpu.vector_store %arg5[%c0_12, %c0_13, %c0_14], %22 {strides = array<i32>} : memref<1x4x256xf32, #tpu.memory_space<vmem>>, vector<1x4x256xf32>,
    return
  }
  func.func @transform_0(%arg0: i32, %arg1: i32) -> (i32, i32, i32) {
    %c0_i32 = arith.constant 0 : i32
    %c0_i32_0 = arith.constant 0 : i32
    return %arg0, %c0_i32, %arg1 : i32, i32, i32
  }
  func.func @transform_1(%arg0: i32, %arg1: i32) -> (i32, i32, i32) {
    %c0_i32 = arith.constant 0 : i32
    %c0_i32_0 = arith.constant 0 : i32
    %c0_i32_1 = arith.constant 0 : i32
    %c0_i32_2 = arith.constant 0 : i32
    return %c0_i32, %c0_i32_0, %c0_i32_1 : i32, i32, i32
  }
  func.func @transform_2(%arg0: i32, %arg1: i32) -> (i32, i32, i32) {
    %c0_i32 = arith.constant 0 : i32
    %c0_i32_0 = arith.constant 0 : i32
    %c0_i32_1 = arith.constant 0 : i32
    %c0_i32_2 = arith.constant 0 : i32
    return %c0_i32, %c0_i32_0, %c0_i32_1 : i32, i32, i32
  }
  func.func @transform_3(%arg0: i32, %arg1: i32) -> (i32, i32, i32) {
    %c0_i32 = arith.constant 0 : i32
    %c0_i32_0 = arith.constant 0 : i32
    return %arg0, %c0_i32, %arg1 : i32, i32, i32
  }
}

</mosaic_0001>

<llo_original>
// kernel: tpu_custom_call.1
$region0: #{tpu_custom_call.1}
  #allocation0 [shape = 'u32[]', space=smem, size = 0x4, offset = 0x4, fixed_abs, tag = 'smem constant byte address 0x4 - core index']
  #allocation1 [shape = 'u32[144,128]{1,0:T(1,128)}', space=vmem, size = 0x12000, scoped, tag = 'internal scratch']
  %s0 = inlined_call_operand.hbm [shape: f32[2,4,256], index: 0, kind: input, shape index: {}]
  %s1 = inlined_call_operand.vmem [shape: f32[1,4,1], index: 1, kind: input, shape index: {}]
  %s2 = inlined_call_operand.vmem [shape: f32[1,4,1], index: 2, kind: input, shape index: {}]
  %s3 = inlined_call_operand.hbm [shape: f32[2,4,256], index: 3, kind: output, shape index: {}]
  %s4 = sld [smem:[#allocation0]]
  $region49: #{tpu_custom_call.1} parent=0
    _
  %s6 = ssub.s32 1, %s4
  %s7 = scalar_select 0, %s6, %s4
  $region1: #{tpu_custom_call.1} parent=0
    #allocation2 [shape = 'u8[8192]{0}', space=vmem, size = 0x2000, scoped, tag = 'input window, operand 0']
    #allocation3 [shape = 's32[2]{0}', space=sflag, size = 0x8, scoped, tag = 'scoped memory for tpu_custom_call.1']
    #allocation4 [shape = 's32[2]{0}', space=sflag, size = 0x8, scoped, tag = 'scoped memory for tpu_custom_call.1']
    #allocation5 [shape = 'u8[8192]{0}', space=vmem, size = 0x2000, scoped, tag = 'output window, operand 0']
    %8 = vsyncpa [#allocation3], 0
    %s9 = scalar_lea.sflag [#allocation3], 1
    %10 = vsyncpa %s9, 0
    %11 = vsyncpa [#allocation4], 0
    %s12 = scalar_lea.sflag [#allocation4], 1
    %13 = vsyncpa %s12, 0
    loop: start=0, step=1, limit=4
    $region2: #{tpu_custom_call.1} parent=1 // loop_pre_header
      _
    $region3: #{tpu_custom_call.1} parent=1 // loop_header
      %s15 = sphi 0, %s19
      %p16 = scmp.ge.s32.totalorder %s15, 4
      %s22 = sphi 0, %s34
      %s23 = sphi 0, %s30
      %s24 = sphi 0, %s22
      %s25 = sphi 0, %s23
      %s26 = sphi 0, %s24
      %s27 = sphi 0, %s25
      %s39 = sphi 0, %s41
      %s42 = sphi 0, %s39
      %s43 = sphi 0, %s42
      %s59 = sphi 0, %s43
      %s63 = sphi 0, %s63
      %s65 = sphi 0, %s63
      %s66 = sphi 0, %s65
      %s80 = sphi 0, %s66
      %s84 = sphi 0, %s84
      %s86 = sphi 0, %s84
      %s87 = sphi 0, %s86
      %s101 = sphi 0, %s87
      %s109 = sphi 0, %s111
      %s112 = sphi 0, %s109
      %s113 = sphi 0, %s112
      %s129 = sphi 0, %s113
    $region4: #{tpu_custom_call.1} parent=1 // loop_header_branch
      %18 = sbr.rel (%p16) target = $region8
    $region5: #{tpu_custom_call.1} parent=1 // loop_body
      %s20 = ssub.s32 %s15, 1
      %s21 = ssub.s32 %s15, 2
      %s28 = sadd.s32 1, %s23
      %p29 = scmp.ge.s32.totalorder %s28, 1
      %s30 = scalar_select %p29, 0, %s28
      %s31 = sadd.s32 1, %s22
      %s32 = scalar_select %p29, %s31, %s22
      %p33 = scmp.ge.s32.totalorder %s32, 2
      %s34 = scalar_select %p33, 0, %s32
      %s35 = ssub.s32 %s22, %s34
      %s36 = ssub.s32 %s23, %s30
      %s37 = sor.u32 %s35, %s36
      %p38 = scmp.eq.s32.totalorder %s37, 0
      %s40 = sadd.s32 %s39, 1
      %s41 = scalar_select %p38, %s39, %s40
      %p44 = pneg %p38
      %p45 = scmp.eq.s32.totalorder %s15, 1
      %p46 = por %p44, %p45
      %p47 = scmp.ne.s32.totalorder %s39, %s42
      %p48 = scmp.eq.s32.totalorder %s15, 0
      %p49 = por %p47, %p48
      %p50 = scmp.ne.s32.totalorder %s39, %s42
      %p51 = scmp.eq.s32.totalorder %s20, 1
      %p52 = por %p50, %p51
      %p53 = scmp.ne.s32.totalorder %s42, %s43
      %p54 = scmp.eq.s32.totalorder %s20, 0
      %p55 = por %p53, %p54
      %p56 = scmp.ne.s32.totalorder %s42, %s43
      %p57 = scmp.eq.s32.totalorder %s21, 1
      %p58 = por %p56, %p57
      %p60 = scmp.ne.s32.totalorder %s43, %s59
      %p61 = scmp.eq.s32.totalorder %s21, 0
      %p62 = por %p60, %p61
      %s64 = sadd.s32 %s63, 1
      %p67 = scmp.eq.s32.totalorder %s15, 1
      %p68 = scmp.ne.s32.totalorder %s63, %s65
      %p69 = scmp.eq.s32.totalorder %s15, 0
      %p70 = por %p68, %p69
      %p71 = scmp.ne.s32.totalorder %s63, %s65
      %p72 = scmp.eq.s32.totalorder %s20, 1
      %p73 = por %p71, %p72
      %p74 = scmp.ne.s32.totalorder %s65, %s66
      %p75 = scmp.eq.s32.totalorder %s20, 0
      %p76 = por %p74, %p75
      %p77 = scmp.ne.s32.totalorder %s65, %s66
      %p78 = scmp.eq.s32.totalorder %s21, 1
      %p79 = por %p77, %p78
      %p81 = scmp.ne.s32.totalorder %s66, %s80
      %p82 = scmp.eq.s32.totalorder %s21, 0
      %p83 = por %p81, %p82
      %s85 = sadd.s32 %s84, 1
      %p88 = scmp.eq.s32.totalorder %s15, 1
      %p89 = scmp.ne.s32.totalorder %s84, %s86
      %p90 = scmp.eq.s32.totalorder %s15, 0
      %p91 = por %p89, %p90
      %p92 = scmp.ne.s32.totalorder %s84, %s86
      %p93 = scmp.eq.s32.totalorder %s20, 1
      %p94 = por %p92, %p93
      %p95 = scmp.ne.s32.totalorder %s86, %s87
      %p96 = scmp.eq.s32.totalorder %s20, 0
      %p97 = por %p95, %p96
      %p98 = scmp.ne.s32.totalorder %s86, %s87
      %p99 = scmp.eq.s32.totalorder %s21, 1
      %p100 = por %p98, %p99
      %p102 = scmp.ne.s32.totalorder %s87, %s101
      %p103 = scmp.eq.s32.totalorder %s21, 0
      %p104 = por %p102, %p103
      %s105 = ssub.s32 %s22, %s34
      %s106 = ssub.s32 %s23, %s30
      %s107 = sor.u32 %s105, %s106
      %p108 = scmp.eq.s32.totalorder %s107, 0
      %s110 = sadd.s32 %s109, 1
      %s111 = scalar_select %p108, %s109, %s110
      %p114 = pneg %p108
      %p115 = scmp.eq.s32.totalorder %s15, 1
      %p116 = por %p114, %p115
      %p117 = scmp.ne.s32.totalorder %s109, %s112
      %p118 = scmp.eq.s32.totalorder %s15, 0
      %p119 = por %p117, %p118
      %p120 = scmp.ne.s32.totalorder %s109, %s112
      %p121 = scmp.eq.s32.totalorder %s20, 1
      %p122 = por %p120, %p121
      %p123 = scmp.ne.s32.totalorder %s112, %s113
      %p124 = scmp.eq.s32.totalorder %s20, 0
      %p125 = por %p123, %p124
      %p126 = scmp.ne.s32.totalorder %s112, %s113
      %p127 = scmp.eq.s32.totalorder %s21, 1
      %p128 = por %p126, %p127
      %p130 = scmp.ne.s32.totalorder %s113, %s129
      %p131 = scmp.eq.s32.totalorder %s21, 0
      %p132 = por %p130, %p131
      %p133 = scmp.le.s32.totalorder 1, %s15
      %p134 = scmp.lt.s32.totalorder %s15, 3
      %p135 = pnand %p133, %p134
      %p136 = pneg %p135
      // Predicated region
      $region9: #{tpu_custom_call.1} parent=5 // pred_check
        _
      $region10: #{tpu_custom_call.1} parent=5 // pred_check_branch
        %138 = sbr.rel (%p135) target = $region12
      $region11: #{tpu_custom_call.1} parent=5 // pred_region
        %s139 = ssub.s32 %s15, 1
        // Predicated region
        $region13: #{tpu_custom_call.1} parent=11 // pred_check
          %p140 = pneg %p76
        $region14: #{tpu_custom_call.1} parent=11 // pred_check_branch
          %142 = sbr.rel (%p140) target = $region16
        $region15: #{tpu_custom_call.1} parent=11 // pred_region
          _
        $region16: #{tpu_custom_call.1} parent=11 // pred_fallthru
          _
        // Predicated region
        $region17: #{tpu_custom_call.1} parent=11 // pred_check
          %p143 = pneg %p97
        $region18: #{tpu_custom_call.1} parent=11 // pred_check_branch
          %145 = sbr.rel (%p143) target = $region20
        $region19: #{tpu_custom_call.1} parent=11 // pred_region
          _
        $region20: #{tpu_custom_call.1} parent=11 // pred_fallthru
          _
      $region12: #{tpu_custom_call.1} parent=5 // pred_fallthru
        _
      %p146 = scmp.lt.s32.totalorder %s15, 2
      // Predicated region
      $region21: #{tpu_custom_call.1} parent=5 // pred_check
        %p147 = pneg %p146
      $region22: #{tpu_custom_call.1} parent=5 // pred_check_branch
        %149 = sbr.rel (%p147) target = $region24
      $region23: #{tpu_custom_call.1} parent=5 // pred_region
        // Predicated region
        $region25: #{tpu_custom_call.1} parent=23 // pred_check
          %p150 = pneg %p49
        $region26: #{tpu_custom_call.1} parent=23 // pred_check_branch
          %152 = sbr.rel (%p150) target = $region28
        $region27: #{tpu_custom_call.1} parent=23 // pred_region
          %s153 = sand.u32 %s39, 1
          %s154 = scalar_lea.sflag [#allocation3], %s153
          %s155 = sand.u32 %s39, 1
          %s156 = smul.addr %s155, 8
          %s157 = scalar_lea.vmem [#allocation2], %s156
          %s158 = smul.u32 2, %s23
          %s160 = ssub.s32 128, 128
          %161 = vsyncadd %s154, %s160
          %s162 = smul.addr %s22, 2
          %s163 = sadd.s32 %s158, %s162
          %s164 = smul.addr %s163, 64
          %s165 = scalar_lea.hbm %s0, %s164
          %s167 = sshll.u32 %s157, 4
          %s168 = int_to_ptr.vmem [resolvable:$true] %s167
          %170 = dma.hbm_to_vmem [thread:$0]  %s165, 128, %s168, %s154
        $region28: #{tpu_custom_call.1} parent=23 // pred_fallthru
          _
      $region24: #{tpu_custom_call.1} parent=5 // pred_fallthru
        _
      %p171 = scmp.le.s32.totalorder 1, %s15
      %p172 = scmp.lt.s32.totalorder %s15, 3
      %p173 = pnand %p171, %p172
      %p174 = pneg %p173
      // Predicated region
      $region29: #{tpu_custom_call.1} parent=5 // pred_check
        _
      $region30: #{tpu_custom_call.1} parent=5 // pred_check_branch
        %176 = sbr.rel (%p173) target = $region32
      $region31: #{tpu_custom_call.1} parent=5 // pred_region
        %s177 = ssub.s32 %s15, 1
        %s178 = sand.u32 %s42, 1
        %s179 = scalar_lea.sflag [#allocation3], %s178
        %s180 = sand.u32 %s42, 1
        %s181 = smul.addr %s180, 8
        %s182 = scalar_lea.vmem [#allocation2], %s181
        // Predicated region
        $region33: #{tpu_custom_call.1} parent=31 // pred_check
          %p183 = pneg %p55
        $region34: #{tpu_custom_call.1} parent=31 // pred_check_branch
          %185 = sbr.rel (%p183) target = $region36
        $region35: #{tpu_custom_call.1} parent=31 // pred_region
          %186 = dma.done %s179, 128
        $region36: #{tpu_custom_call.1} parent=31 // pred_fallthru
          _
        %s187 = sand.u32 %s42, 1
        %s188 = scalar_lea.sflag [#allocation3], %s187
        %s189 = sand.u32 %s42, 1
        %s190 = smul.addr %s189, 8
        %s191 = scalar_lea.vmem [#allocation2], %s190
        %p192 = pneg %p55
        %p193 = pneg %p52
        %p194 = pneg %p76
        %p195 = pneg %p73
        %p196 = pneg %p97
        %p197 = pneg %p94
        %p198 = pneg %p125
        %p199 = pneg %p122
        %s200 = sand.u32 %s112, 1
        %s201 = scalar_lea.sflag [#allocation4], %s200
        %s202 = sand.u32 %s112, 1
        %s203 = smul.addr %s202, 8
        %s204 = scalar_lea.vmem [#allocation5], %s203
        %s205 = smul.u32 2, %s25
        %s206 = smul.u32 2, %s25
        %v207 = vld [vmem:[%s182] sm:$0xff]
        %v209 = vcombine.high %v207, %v207
        %vm211 = vcmask 1043456
        %v212 = vsel %vm211, %v207, 0.0
        %v213 = vrot.slane %v212, 4
        %v214 = vadd.f32 %v212, %v213
        %v215 = vrot.slane %v214, 2
        %v216 = vadd.f32 %v214, %v215
        %v217 = vrot.slane %v216, 1
        %v218 = vadd.f32 %v216, %v217
        %v219 = vsel %vm211, %v209, 0.0
        %v220 = vrot.slane %v219, 4
        %v221 = vadd.f32 %v219, %v220
        %v222 = vrot.slane %v221, 2
        %v223 = vadd.f32 %v221, %v222
        %v224 = vrot.slane %v223, 1
        %v225 = vadd.f32 %v223, %v224
        %v226 = vmul.f32 %v218, 0.25
        %v227 = vmul.f32 %v225, 0.25
        %v230 = vcombine.low %v226, %v227
        %v232 = vsub.f32 %v207, %v230
        %v233 = vmul.f32 %v232, %v232
        %v235 = vcombine.high %v233, %v233
        %v237 = vsel %vm211, %v233, 0.0
        %v238 = vrot.slane %v237, 4
        %v239 = vadd.f32 %v237, %v238
        %v240 = vrot.slane %v239, 2
        %v241 = vadd.f32 %v239, %v240
        %v242 = vrot.slane %v241, 1
        %v243 = vadd.f32 %v241, %v242
        %v244 = vsel %vm211, %v235, 0.0
        %v245 = vrot.slane %v244, 4
        %v246 = vadd.f32 %v244, %v245
        %v247 = vrot.slane %v246, 2
        %v248 = vadd.f32 %v246, %v247
        %v249 = vrot.slane %v248, 1
        %v250 = vadd.f32 %v248, %v249
        %v251 = vmul.f32 %v243, 0.25
        %v252 = vmul.f32 %v250, 0.25
        %v253 = vadd.f32 %v251, 1e-05
        %v254 = vadd.f32 %v252, 1e-05
        %v255 = vrsqrt.pop %v253
        %v256 = vrsqrt.pop %v254
        %v257 = vld [vmem:[%s1] sm:$0xf]
        %v258 = vld [vmem:[%s2] sm:$0xf]
        %v261 = vcombine.low %v255, %v256
        %v263 = vmul.f32 %v232, %v261
        %265 = vset.pattern.permute.xlu0 0
        %266 = vperm.xlu0 %265, %v257
        %v267 = vpop.permute.xlu0 %266
        %v269 = vunpack.c.l.s4 839922192
        %v270 = vunpack.c.0.s8 %v269
        %v271 = vlaneseq
        %v272 = vshrl.u32 %v271, 7
        %v273 = vsub.s32 %v270, %v272
        %v274 = vrot.slane %v267, %v273
        %v276 = vmul.f32 %v263, %v274
        %278 = vset.pattern.permute.xlu0 0
        %279 = vperm.xlu0 %278, %v258
        %v280 = vpop.permute.xlu0 %279
        %v282 = vunpack.c.l.s4 839922192
        %v283 = vunpack.c.0.s8 %v282
        %v284 = vlaneseq
        %v285 = vshrl.u32 %v284, 7
        %v286 = vsub.s32 %v283, %v285
        %v287 = vrot.slane %v280, %v286
        %v289 = vadd.f32 %v276, %v287
        %290 = vst [vmem:[%s204] sm:$0xff] %v289
        %s291 = sand.u32 %s112, 1
        %s292 = scalar_lea.sflag [#allocation4], %s291
        %s293 = sand.u32 %s112, 1
        %s294 = smul.addr %s293, 8
        %s295 = scalar_lea.vmem [#allocation5], %s294
        // Predicated region
        $region37: #{tpu_custom_call.1} parent=31 // pred_check
          %p296 = pneg %p122
        $region38: #{tpu_custom_call.1} parent=31 // pred_check_branch
          %298 = sbr.rel (%p296) target = $region40
        $region39: #{tpu_custom_call.1} parent=31 // pred_region
          %s299 = smul.u32 2, %s25
          %s301 = ssub.s32 128, 128
          %302 = vsyncadd %s292, %s301
          %s303 = smul.addr %s24, 2
          %s304 = sadd.s32 %s299, %s303
          %s305 = smul.addr %s304, 64
          %s306 = scalar_lea.hbm %s3, %s305
          %s308 = sshll.u32 %s295, 4
          %s309 = int_to_ptr.vmem [resolvable:$true] %s308
          %311 = dma.vmem_to_hbm [thread:$0]  %s309, 128, %s306, %s292
        $region40: #{tpu_custom_call.1} parent=31 // pred_fallthru
          _
      $region32: #{tpu_custom_call.1} parent=5 // pred_fallthru
        _
      %p312 = scmp.le.s32.totalorder 2, %s15
      // Predicated region
      $region41: #{tpu_custom_call.1} parent=5 // pred_check
        %p313 = pneg %p312
      $region42: #{tpu_custom_call.1} parent=5 // pred_check_branch
        %315 = sbr.rel (%p313) target = $region44
      $region43: #{tpu_custom_call.1} parent=5 // pred_region
        %s316 = ssub.s32 %s15, 2
        // Predicated region
        $region45: #{tpu_custom_call.1} parent=43 // pred_check
          %p317 = pneg %p128
        $region46: #{tpu_custom_call.1} parent=43 // pred_check_branch
          %319 = sbr.rel (%p317) target = $region48
        $region47: #{tpu_custom_call.1} parent=43 // pred_region
          %s320 = sand.u32 %s113, 1
          %s321 = scalar_lea.sflag [#allocation4], %s320
          %s322 = sand.u32 %s113, 1
          %s323 = smul.addr %s322, 8
          %s324 = scalar_lea.vmem [#allocation5], %s323
          %325 = dma.done %s321, 128
        $region48: #{tpu_custom_call.1} parent=43 // pred_fallthru
          _
      $region44: #{tpu_custom_call.1} parent=5 // pred_fallthru
        _
    $region6: #{tpu_custom_call.1} parent=1 // loop_footer
      %s19 = sadd.s32 1, %s15
    $region7: #{tpu_custom_call.1} parent=1 // loop_footer_branch
      %14 = sbr.rel target = $region3
    $region8: #{tpu_custom_call.1} parent=1 // loop_exit
      _
    %326 = vsyncpa [#allocation3], 1
    %s327 = scalar_lea.sflag [#allocation3], 1
    %328 = vsyncpa %s327, 1
    %329 = vsyncpa [#allocation4], 1
    %s330 = scalar_lea.sflag [#allocation4], 1
    %331 = vsyncpa %s330, 1

</llo_original>
